<compile_context>
chip_gen: v7x
topology: tpu7x:2x2x1
jax: 0.10.0
libtpu: 0.0.40
codegen_flags: <defaults>
</compile_context>

<pallas_src>
import jax
import jax.numpy as jnp
from jax.experimental import pallas as pl
from jax.experimental.pallas import tpu as pltpu


# ----------------------------- kernel body ----------------------------------


def _cross_decomp_kernel(x_ref, coef_ref, bias_ref, o_ref):
    # One fused MXU matmul (f32 accumulation) + broadcast bias add.
    o_ref[...] = (
        jnp.dot(x_ref[...], coef_ref[...], preferred_element_type=jnp.float32)
        + bias_ref[...]
    )


# ----------------------------- helpers ---------------------------------------


def _round_up(n, m):
    return ((n + m - 1) // m) * m


def _cdiv(a, b):
    return -(-a // b)


def _vmem_tile_bytes(rows, cols, itemsize):
    # VMEM tiles are laid out in (8, 128) granules.
    return _round_up(max(rows, 1), 8) * _round_up(max(cols, 1), 128) * itemsize


def _resident_spec(block_shape):
    """BlockSpec for a grid-invariant (resident) operand, single-buffered."""
    index_map = lambda i: (0, 0)
    try:
        return pl.BlockSpec(block_shape, index_map, pipeline_mode=pl.Buffered(1))
    except (TypeError, ValueError):
        # Older Pallas without pipeline_mode / Buffered(1): fall back to the
        # default (double-buffered) spec; correctness unchanged.
        return pl.BlockSpec(block_shape, index_map)


def fold_cross_decomposition_params(x_mean, x_std, y_mean, coefficients,
                                    *, out_width=None,
                                    coef_dtype=jnp.float32):
    """Fold (x - mean) / std into the matmul parameters.

    Returns (coef_folded, bias) of shape (F, out_width) / (1, out_width),
    zero-padded along the output dim when out_width > T.  This is a pure
    function of the (static) module parameters -- jit / cache its result when
    serving many batches so the F*T fold is not repaid on every forward call.
    """
    xm = x_mean.astype(jnp.float32)
    xs = x_std.astype(jnp.float32)
    ym = y_mean.astype(jnp.float32)
    coef = coefficients.astype(jnp.float32)
    F, T = coef.shape
    if out_width is None:
        out_width = T

    # NOTE: matches torch semantics exactly -- a zero std yields inf just like
    # the unfused (x - m) / s would.  Clamp x_std upstream if zeros are
    # possible, since here it poisons the whole coefficient row.
    inv_std = 1.0 / xs
    coef_folded = coef * inv_std[:, None]                  # (F, T)
    bias = (ym - (xm * inv_std) @ coef).reshape(1, T)      # (1, T)

    if out_width != T:
        coef_folded = jnp.zeros((F, out_width), jnp.float32).at[:, :T].set(coef_folded)
        bias = jnp.zeros((1, out_width), jnp.float32).at[:, :T].set(bias)

    return coef_folded.astype(coef_dtype), bias.astype(jnp.float32)


# ----------------------------- wrapper ---------------------------------------


def cross_decomposition(x, x_mean, x_std, y_mean, coefficients, *,
                        tm=None,
                        stream_dtype=None,
                        lane_pad_out=None,
                        vmem_budget_bytes=40 * 1024 * 1024):
    """Pallas implementation of CrossDecomposition.forward.

    x:            (M, F) float32
    x_mean:       (F,)   float32
    x_std:        (F,)   float32
    coefficients: (F, T) float32
    y_mean:       (T,)   float32
    returns:      (M, T) float32

    stream_dtype: optionally jnp.bfloat16 to halve HBM bytes on the x / coef
                  streams (f32 accumulation and f32 bias are kept).
    """
    M, F = x.shape
    Fc, T = coefficients.shape
    assert F == Fc, (F, Fc)

    x_dtype = jnp.dtype(stream_dtype) if stream_dtype is not None else jnp.dtype(jnp.float32)
    x_item = x_dtype.itemsize

    # --- output width: lane-dense (T padded to 128) only when the extra
    # padded output bytes are small relative to the per-row x stream; for
    # tiny F and tiny T the padded writes would dominate HBM traffic. ---
    T_pad = _round_up(T, 128)
    if lane_pad_out is None:
        lane_pad_out = (T_pad != T) and (2 * (T_pad - T) * 4 <= F * x_item)
    T_out = T_pad if (lane_pad_out and T_pad != T) else T

    # --- fold normalization into the (cacheable) parameters ---
    coef_folded, bias = fold_cross_decomposition_params(
        x_mean, x_std, y_mean, coefficients, out_width=T_out, coef_dtype=x_dtype)
    x_in = x.astype(x_dtype)

    # --- row-tile selection from a VMEM budget ---
    coef_bytes = _vmem_tile_bytes(F, T_out, x_item)          # resident, 1 buffer
    bias_bytes = _vmem_tile_bytes(1, T_out, 4)                # resident, 1 buffer
    fixed = coef_bytes + bias_bytes
    per_row = 2 * _round_up(F, 128) * x_item + 2 * _round_up(T_out, 128) * 4
    # TODO(synk): add a K grid axis + f32 VMEM accumulator (pl.when init /
    # finalize) when the resident folded-coefficient block exceeds the VMEM
    # budget (very large F*T); not needed for typical PLS head sizes.
    if vmem_budget_bytes > fixed:
        tm_budget = max(8, ((vmem_budget_bytes - fixed) // per_row) // 8 * 8)
    else:
        tm_budget = 8

    if tm is None:
        # >= 2 grid steps whenever M > 8 so both v7x TensorCores get work,
        # capped by the VMEM budget and 1024 rows (near HBM-roofline tile).
        tm = min(1024, tm_budget, max(8, _round_up(_cdiv(M, 2), 8)))
    else:
        tm = max(8, _round_up(int(tm), 8))
    grid = (_cdiv(M, tm),)

    vmem_need = (fixed
                 + 2 * _vmem_tile_bytes(tm, F, x_item)        # x, double-buffered
                 + 2 * _vmem_tile_bytes(tm, T_out, 4))         # out, double-buffered
    vmem_limit = int(max(32 * 1024 * 1024, vmem_need + 4 * 1024 * 1024))

    out = pl.pallas_call(
        _cross_decomp_kernel,
        out_shape=jax.ShapeDtypeStruct((M, T_out), jnp.float32),
        grid_spec=pltpu.PrefetchScalarGridSpec(
            num_scalar_prefetch=0,
            grid=grid,
            in_specs=[
                pl.BlockSpec((tm, F), lambda i: (i, 0)),   # streamed x row tile
                _resident_spec((F, T_out)),                # folded coef (resident)
                _resident_spec((1, T_out)),                # folded bias (resident)
            ],
            out_specs=pl.BlockSpec((tm, T_out), lambda i: (i, 0)),
        ),
        compiler_params=pltpu.CompilerParams(
            dimension_semantics=("parallel",),
            vmem_limit_bytes=vmem_limit,
        ),
    )(x_in, coef_folded, bias)

    return out if T_out == T else out[:, :T]


# ----------------------------- self-test --------------------------------------


if __name__ == "__main__":
    key = jax.random.PRNGKey(0)
    k_x, k_m, k_s, k_c, k_y, k_x2 = jax.random.split(key, 6)

    def ref_fn(x, xm, xs, ym, coef):
        return ((x - xm[None, :]) / xs[None, :]) @ coef + ym[None, :]

    # Shared parameters (small shapes consistent with torch.mm(x, coefficients)).
    F, T = 32, 8
    x_mean = jax.random.normal(k_m, (F,), dtype=jnp.float32)
    x_std = jax.random.uniform(k_s, (F,), dtype=jnp.float32, minval=0.5, maxval=2.0)
    coefficients = jax.random.normal(k_c, (F, T), dtype=jnp.float32) * 0.1
    y_mean = jax.random.normal(k_y, (T,), dtype=jnp.float32)

    # Case 1: tiny batch, unpadded-T (masked store) path, single grid step.
    M1 = 8
    x1 = jax.random.normal(k_x, (M1, F), dtype=jnp.float32)
    out1 = jax.block_until_ready(
        cross_decomposition(x1, x_mean, x_std, y_mean, coefficients))
    ref1 = ref_fn(x1, x_mean, x_std, y_mean, coefficients)
    assert out1.shape == (M1, T)
    assert jnp.allclose(out1, ref1, atol=1e-4, rtol=1e-4)

    # Case 2: ragged last row block (M % tm != 0) + lane-dense padded output.
    M2 = 40
    x2 = jax.random.normal(k_x2, (M2, F), dtype=jnp.float32)
    out2 = jax.block_until_ready(
        cross_decomposition(x2, x_mean, x_std, y_mean, coefficients,
                            tm=16, lane_pad_out=True))
    ref2 = ref_fn(x2, x_mean, x_std, y_mean, coefficients)
    assert out2.shape == (M2, T)
    assert jnp.allclose(out2, ref2, atol=1e-4, rtol=1e-4)

    print("KERNEL_OK")
</pallas_src>

<mosaic_0001>
module attributes {stable_mosaic.version = 11 : i64} {
  func.func @_cross_decomp_kernel(%arg0: i32, %arg1: memref<8x32xf32, #tpu.memory_space<vmem>>, %arg2: memref<32x8xf32, #tpu.memory_space<vmem>>, %arg3: memref<1x8xf32, #tpu.memory_space<vmem>>, %arg4: memref<8x8xf32, #tpu.memory_space<vmem>>) attributes {dimension_semantics = [#tpu.dimension_semantics<parallel>], iteration_bounds = array<i64: 1>, scalar_prefetch = 0 : i64, scratch_operands = 0 : i64, tpu.core_type = #tpu.core_type<tc>, window_params = [{transform_indices = @transform_0, window_bounds = array<i64: 8, 32>}, {pipeline_mode = #tpu.pipeline_mode<synchronous>, transform_indices = @transform_1, window_bounds = array<i64: 32, 8>}, {pipeline_mode = #tpu.pipeline_mode<synchronous>, transform_indices = @transform_2, window_bounds = array<i64: 1, 8>}, {transform_indices = @transform_3, window_bounds = array<i64: 8, 8>}]} {
    %c0 = arith.constant 0 : index
    %c0_0 = arith.constant 0 : index
    %0 = vector.load %arg1[%c0, %c0_0] : memref<8x32xf32, #tpu.memory_space<vmem>>, vector<8x32xf32>
    %c0_1 = arith.constant 0 : index
    %c0_2 = arith.constant 0 : index
    %1 = vector.load %arg2[%c0_1, %c0_2] : memref<32x8xf32, #tpu.memory_space<vmem>>, vector<32x8xf32>
    %cst = arith.constant dense<0.000000e+00> : vector<8x8xf32>
    %2 = tpu.matmul %0, %1, %cst {dimension_numbers = #tpu.dot_dimension_numbers<[1], [0], [0], [1], [0, 0, 1, 1], [], []>} : vector<8x32xf32>, vector<32x8xf32>, vector<8x8xf32> -> vector<8x8xf32>
    %c0_3 = arith.constant 0 : index
    %c0_4 = arith.constant 0 : index
    %3 = vector.load %arg3[%c0_3, %c0_4] : memref<1x8xf32, #tpu.memory_space<vmem>>, vector<1x8xf32>
    %4 = vector.broadcast %3 : vector<1x8xf32> to vector<8x8xf32>
    %5 = arith.addf %2, %4 : vector<8x8xf32>
    %c0_5 = arith.constant 0 : index
    %c0_6 = arith.constant 0 : index
    %6 = vector.load %arg4[%c0_5, %c0_6] : memref<8x8xf32, #tpu.memory_space<vmem>>, vector<8x8xf32>
    tpu.vector_store %arg4[%c0_5, %c0_6], %5 {strides = array<i32>} : memref<8x8xf32, #tpu.memory_space<vmem>>, vector<8x8xf32>,
    return
  }
  func.func @transform_0(%arg0: i32) -> (i32, i32) {
    %c0_i32 = arith.constant 0 : i32
    %c0_i32_0 = arith.constant 0 : i32
    return %arg0, %c0_i32 : i32, i32
  }
  func.func @transform_1(%arg0: i32) -> (i32, i32) {
    %c0_i32 = arith.constant 0 : i32
    %c0_i32_0 = arith.constant 0 : i32
    %c0_i32_1 = arith.constant 0 : i32
    return %c0_i32, %c0_i32_0 : i32, i32
  }
  func.func @transform_2(%arg0: i32) -> (i32, i32) {
    %c0_i32 = arith.constant 0 : i32
    %c0_i32_0 = arith.constant 0 : i32
    %c0_i32_1 = arith.constant 0 : i32
    return %c0_i32, %c0_i32_0 : i32, i32
  }
  func.func @transform_3(%arg0: i32) -> (i32, i32) {
    %c0_i32 = arith.constant 0 : i32
    %c0_i32_0 = arith.constant 0 : i32
    return %arg0, %c0_i32 : i32, i32
  }
}

</mosaic_0001>

<llo_original>
// kernel: tpu_custom_call.1
$region0: #{tpu_custom_call.1}
  #allocation0 [shape = 'u32[]', space=smem, size = 0x4, offset = 0x4, fixed_abs, tag = 'smem constant byte address 0x4 - core index']
  #allocation1 [shape = 'u32[144,128]{1,0:T(1,128)}', space=vmem, size = 0x12000, scoped, tag = 'internal scratch']
  %s0 = inlined_call_operand.vmem [shape: f32[8,32], index: 0, kind: input, shape index: {}]
  %s1 = inlined_call_operand.vmem [shape: f32[32,8], index: 1, kind: input, shape index: {}]
  %s2 = inlined_call_operand.vmem [shape: f32[1,8], index: 2, kind: input, shape index: {}]
  %s3 = inlined_call_operand.hbm [shape: f32[8,8], index: 3, kind: output, shape index: {}]
  %s4 = sld [smem:[#allocation0]]
  $region22: #{tpu_custom_call.1} parent=0
    _
  %s6 = ssub.s32 1, %s4
  %s7 = scalar_select 0, %s6, %s4
  $region1: #{tpu_custom_call.1} parent=0
    #allocation2 [shape = 'u8[4096]{0}', space=vmem, size = 0x1000, scoped, tag = 'output window, operand 0, single buffered']
    #allocation3 [shape = 's32[1]{0}', space=sflag, size = 0x4, scoped, tag = 'scoped memory for tpu_custom_call.1']
    %8 = vsyncpa [#allocation3], 0
    // Predicated region
    $region2: #{tpu_custom_call.1} parent=1 // pred_check
      _
    $region3: #{tpu_custom_call.1} parent=1 // pred_check_branch
      %10 = sbr.rel (0) target = $region5
    $region4: #{tpu_custom_call.1} parent=1 // pred_region
      _
    $region5: #{tpu_custom_call.1} parent=1 // pred_fallthru
      _
    // Predicated region
    $region6: #{tpu_custom_call.1} parent=1 // pred_check
      _
    $region7: #{tpu_custom_call.1} parent=1 // pred_check_branch
      %12 = sbr.rel (0) target = $region9
    $region8: #{tpu_custom_call.1} parent=1 // pred_region
      _
    $region9: #{tpu_custom_call.1} parent=1 // pred_fallthru
      _
    // Predicated region
    $region10: #{tpu_custom_call.1} parent=1 // pred_check
      _
    $region11: #{tpu_custom_call.1} parent=1 // pred_check_branch
      %14 = sbr.rel (0) target = $region13
    $region12: #{tpu_custom_call.1} parent=1 // pred_region
      _
    $region13: #{tpu_custom_call.1} parent=1 // pred_fallthru
      _
    %v15 = vld [vmem:[%s0] sm:$0xff]
    %v16 = vld [vmem:[%s1] sm:$0xff]
    %v17 = vld [vmem:[%s1 + $0x8] sm:$0xff]
    %v18 = vld [vmem:[%s1 + $0x10] sm:$0xff]
    %v19 = vld [vmem:[%s1 + $0x18] sm:$0xff]
    %v20 = vld [vmem:[%s2] sm:$0x1]
    %v22 = vlaneseq
    %v23 = vshrl.u32 %v22, 7
    %v24 = vsub.s32 0, %v23
    %v25 = vrot.slane %v20, %v24
    %vm27 = vcmask 261120
    %v29 = vsel %vm27, %v15, 0
    %31 = vmatprep.subr.mxu0 0.0
    %32 = vmatpush1.msra.mxu0 %v16
    %33 = vmatprep.subr.mxu0 0.0
    %34 = vmatpush1.msra.mxu0 %v17
    %35 = vmatprep.subr.mxu0 0.0
    %36 = vmatpush1.msra.mxu0 %v18
    %37 = vmatprep.subr.mxu0 0.0
    %38 = vmatpush1.msra.mxu0 %v19
    %39 = vmatprep.subr.mxu0 0.0
    %40 = vmatpush1.msra.mxu0 0.0
    %41 = vmatprep.subr.mxu0 0.0
    %42 = vmatpush1.msra.mxu0 0.0
    %43 = vmatprep.subr.mxu0 0.0
    %44 = vmatpush1.msra.mxu0 0.0
    %45 = vmatprep.subr.mxu0 0.0
    %46 = vmatpush1.msra.mxu0 0.0
    %47 = vmatprep.subr.mxu0 0.0
    %48 = vmatpush1.msra.mxu0 0.0
    %49 = vmatprep.subr.mxu0 0.0
    %50 = vmatpush1.msra.mxu0 0.0
    %51 = vmatprep.subr.mxu0 0.0
    %52 = vmatpush1.msra.mxu0 0.0
    %53 = vmatprep.subr.mxu0 0.0
    %54 = vmatpush1.msra.mxu0 0.0
    %55 = vmatprep.subr.mxu0 0.0
    %56 = vmatpush1.msra.mxu0 0.0
    %57 = vmatprep.subr.mxu0 0.0
    %58 = vmatpush1.msra.mxu0 0.0
    %59 = vmatprep.subr.mxu0 0.0
    %60 = vmatpush1.msra.mxu0 0.0
    %61 = vmatprep.subr.mxu0 0.0
    %62 = vmatpush1.msra.mxu0 0.0
    %63 = vmatprep.subr.mxu0 0.0
    %64 = vmatpush1.msra.mxu0 0.0
    %65 = vmatprep.subr.mxu0 0.0
    %66 = vmatpush1.msra.mxu0 0.0
    %67 = vmatprep.subr.mxu0 0.0
    %68 = vmatpush1.msra.mxu0 0.0
    %69 = vmatprep.subr.mxu0 0.0
    %70 = vmatpush1.msra.mxu0 0.0
    %71 = vmatprep.subr.mxu0 0.0
    %72 = vmatpush1.msra.mxu0 0.0
    %73 = vmatprep.subr.mxu0 0.0
    %74 = vmatpush1.msra.mxu0 0.0
    %75 = vmatprep.subr.mxu0 0.0
    %76 = vmatpush1.msra.mxu0 0.0
    %77 = vmatprep.subr.mxu0 0.0
    %78 = vmatpush1.msra.mxu0 0.0
    %79 = vmatprep.subr.mxu0 0.0
    %80 = vmatpush1.msra.mxu0 0.0
    %81 = vmatprep.subr.mxu0 0.0
    %82 = vmatpush1.msra.mxu0 0.0
    %83 = vmatprep.subr.mxu0 0.0
    %84 = vmatpush1.msra.mxu0 0.0
    %85 = vmatprep.subr.mxu0 0.0
    %86 = vmatpush1.msra.mxu0 0.0
    %87 = vmatprep.subr.mxu0 0.0
    %88 = vmatpush1.msra.mxu0 0.0
    %89 = vmatprep.subr.mxu0 0.0
    %90 = vmatpush1.msra.mxu0 0.0
    %91 = vmatprep.subr.mxu0 0.0
    %92 = vmatpush1.msra.mxu0 0.0
    %93 = vmatprep.subr.mxu0 0.0
    %94 = vmatpush1.msra.mxu0 0.0
    %95 = vmatprep.mubr.f32.mxu0 0.0
    %96 = vmatmul.mubr.f32.gmra.mrb[0].mxu0 %v29
    %v97 = vpop.f32.mrb[0].mxu0
    %v98 = vadd.f32 %v25, %v97
    %v99 = vpop.f32.mrb[0].mxu0
    %100 = vdwg.mxu0
    %vm101 = vcmask 64512
    %102 = vst.msk [vmem:[#allocation2] sm:$0xff] %vm101, %v98
    // Predicated region
    $region14: #{tpu_custom_call.1} parent=1 // pred_check
      _
    $region15: #{tpu_custom_call.1} parent=1 // pred_check_branch
      %104 = sbr.rel (0) target = $region17
    $region16: #{tpu_custom_call.1} parent=1 // pred_region
      %s106 = ssub.s32 128, 128
      %107 = vsyncadd [#allocation3], %s106
      %s109 = sshll.u32 [#allocation2], 4
      %s110 = int_to_ptr.vmem [resolvable:$true] %s109
      %112 = dma.vmem_to_hbm [thread:$0]  %s110, 128, %s3, [#allocation3]
    $region17: #{tpu_custom_call.1} parent=1 // pred_fallthru
      _
    // Predicated region
    $region18: #{tpu_custom_call.1} parent=1 // pred_check
      _
    $region19: #{tpu_custom_call.1} parent=1 // pred_check_branch
      %114 = sbr.rel (0) target = $region21
    $region20: #{tpu_custom_call.1} parent=1 // pred_region
      %115 = dma.done [#allocation3], 128
    $region21: #{tpu_custom_call.1} parent=1 // pred_fallthru
      _
    %116 = vsyncpa [#allocation3], 1

</llo_original>
